<compile_context>
chip_gen: v7x
topology: tpu7x:2x2x1
jax: 0.10.0
libtpu: 0.0.40
codegen_flags: <defaults>
</compile_context>

<pallas_src>
import functools

import jax
import jax.numpy as jnp
from jax import lax
from jax.experimental import pallas as pl
from jax.experimental.pallas import tpu as pltpu


def _round_up(x: int, m: int) -> int:
    return ((x + m - 1) // m) * m


def _cdiv(a: int, b: int) -> int:
    return -(-a // b)


def _device_kind() -> str:
    try:
        return jax.devices()[0].device_kind.lower()
    except Exception:
        return ""


def _vmem_capacity_bytes() -> int:
    try:
        cap = int(getattr(pltpu.get_tpu_info(), "vmem_capacity_bytes", 0) or 0)
        if cap > 0:
            return cap
    except Exception:
        pass
    return 64 * 1024 * 1024  # conservative fallback (v7x per-TC physical VMEM)


def _mcc_kernel(x_ref, out_ref, acc_ref, *, t: float, c: int, n_valid: int,
                tile_n: int, tiles_per_split: int, num_splits: int,
                needs_mask: bool, use_bf16_matmul: bool,
                approx_reciprocal: bool, exact_torch_entropy: bool,
                fold_epilogue: bool):
    if num_splits > 1:
        s, k = pl.program_id(0), pl.program_id(1)
    else:
        s, k = 0, pl.program_id(0)

    @pl.when(k == 0)
    def _zero():
        acc_ref[...] = jnp.zeros_like(acc_ref)

    # Per-tile cast in VMEM: HBM side stays in the input's native (bf16-capable)
    # dtype, halving DMA bytes vs an f32 wrapper upcast.
    x = x_ref[...].astype(jnp.float32) * (1.0 / t)

    if needs_mask:
        # The ragged tail is a partial edge block; out-of-bounds rows are
        # undefined, so the logits must be masked (not just w) to keep Inf/NaN
        # out of exp and the matmul.
        row = lax.broadcasted_iota(jnp.int32, (tile_n, c), 0)
        row_start = (s * tiles_per_split + k) * tile_n
        valid = row < (n_valid - row_start)
        x = jnp.where(valid, x, 0.0)

    # ---- softmax over classes with temperature t -------------------------
    x_max = jnp.max(x, axis=1, keepdims=True)
    xs = x - x_max
    ex = jnp.exp(xs)
    denom = jnp.sum(ex, axis=1, keepdims=True)                  # [tile_n, 1]
    if approx_reciprocal:
        inv = pl.reciprocal(denom, approx=True)                 # EUP slot
        inv = inv * (2.0 - denom * inv)                         # Newton step
    else:
        inv = pl.reciprocal(denom, approx=False)
    sm = ex * inv                                               # [tile_n, C]

    # ---- entropy weight ---------------------------------------------------
    if exact_torch_entropy:
        entropy = -jnp.sum(sm * jnp.log(sm + 1e-5), axis=1, keepdims=True)
    else:
        # log-softmax identity + sum(sm)==1:  H = log(denom) - sum(sm * xs).
        entropy = jnp.log(denom) - jnp.sum(sm * xs, axis=1, keepdims=True)
    w = 1.0 + jnp.exp(-entropy)                                 # [tile_n, 1]
    # torch's global `w = n*w/sum(w)` is a scalar on w and cancels exactly
    # through the ccm column-sum division -> intentionally dropped.

    weighted = sm * w
    if needs_mask:
        weighted = jnp.where(valid, weighted, 0.0)  # padded rows contribute 0

    if use_bf16_matmul:
        lhs, rhs = weighted.astype(jnp.bfloat16), sm.astype(jnp.bfloat16)
    else:
        lhs, rhs = weighted, sm

    # Partial class-confusion matrix: (sm * w)^T @ sm, contracted over rows.
    acc_ref[...] += lax.dot_general(
        lhs, rhs,
        dimension_numbers=(((0,), (0,)), ((), ())),
        preferred_element_type=jnp.float32)

    @pl.when(k == tiles_per_split - 1)
    def _finalize():
        ccm = acc_ref[...]
        if fold_epilogue:
            # ccm[i,j] = sum_n w_n sm[n,i] sm[n,j] is symmetric, so
            # colsum == rowsum and sum_j colsum[j]/rowsum[j] == C exactly:
            #   loss = 1 - (1/C) * sum_j ccm[j,j] / rowsum[j].
            rowsum = jnp.sum(ccm, axis=1, keepdims=True)               # (C,1)
            eye = (lax.broadcasted_iota(jnp.int32, (c, c), 0)
                   == lax.broadcasted_iota(jnp.int32, (c, c), 1))
            diag = jnp.sum(jnp.where(eye, ccm, 0.0), axis=1, keepdims=True)
            trace_term = jnp.sum(diag / rowsum, axis=0, keepdims=True)  # (1,1)
            out_ref[...] = 1.0 - trace_term * (1.0 / c)
        else:
            out_ref[...] = ccm


def class_confusion_loss(output: jax.Array, t: float = 2.0, *,
                         tile_n=None, use_bf16_matmul=None,
                         approx_reciprocal: bool = True,
                         exact_torch_entropy: bool = False) -> jax.Array:
    """output: [N, C] logits in any float dtype. Returns scalar f32 MCC loss."""
    n, c = output.shape
    in_bytes = jnp.dtype(output.dtype).itemsize

    # bf16 MXU only pays off when compute-bound (wide C); for small C the
    # kernel is HBM-bound and the casts are wasted VPU work.
    if use_bf16_matmul is None:
        use_bf16_matmul = c >= 512

    # ---- generation-aware VMEM budget ------------------------------------
    vmem_cap = _vmem_capacity_bytes()          # 128 MiB v5e/v6e, 64 MiB v7x/TC
    vmem_limit = int(min(vmem_cap * 3 // 4, 112 * 1024 * 1024))

    # Two TensorCores per chip only on v7x -> 2-way CORE_PARALLEL split there;
    # single sequential grid everywhere else (a split is pure overhead on
    # single-TC v5e/v6e).
    kind = _device_kind()
    two_tc = ("v7" in kind) or ("tpu7" in kind)
    num_splits = 2 if (two_tc and n >= 16) else 1

    # ---- tile sizing: biggest row tile that fits the budget ---------------
    # Resident (C,C) accumulator + 2 double-buffered native-dtype input tiles
    # + ~6 live f32 (tile_n, C) intermediates.
    acc_bytes = _round_up(c, 8) * _round_up(c, 128) * 4
    # TODO(synk): for very wide C (>= ~2048) the resident (C,C) accumulator no
    # longer fits v7x VMEM; add an output-column tiling grid axis for that case.
    avail = max(vmem_limit - 2 * acc_bytes - 8 * 1024 * 1024, 2 * 1024 * 1024)
    per_row = c * (2 * in_bytes + 6 * 4)
    max_tile = max(8, min((avail // per_row) // 8 * 8, 32768))

    rows_per_split = _cdiv(n, num_splits)
    want = _round_up(rows_per_split if tile_n is None else int(tile_n), 8)
    tile_n = int(min(want, max_tile, _round_up(rows_per_split, 8)))

    tiles_per_split = _cdiv(rows_per_split, tile_n)
    needs_mask = (num_splits * tiles_per_split * tile_n) != n
    fold_epilogue = (num_splits == 1)

    kernel = functools.partial(
        _mcc_kernel, t=float(t), c=c, n_valid=n, tile_n=tile_n,
        tiles_per_split=tiles_per_split, num_splits=num_splits,
        needs_mask=needs_mask, use_bf16_matmul=use_bf16_matmul,
        approx_reciprocal=approx_reciprocal,
        exact_torch_entropy=exact_torch_entropy, fold_epilogue=fold_epilogue)

    cost = pl.CostEstimate(
        flops=2 * n * c * c + 12 * n * c,
        transcendentals=n * c + 3 * n,
        bytes_accessed=n * c * in_bytes + num_splits * c * c * 4)

    if fold_epilogue:
        # Single grid axis over N tiles; the O(C) epilogue runs on the last
        # step and only a (1,1) scalar leaves the kernel.
        out = pl.pallas_call(
            kernel,
            out_shape=jax.ShapeDtypeStruct((1, 1), jnp.float32),
            grid_spec=pltpu.PrefetchScalarGridSpec(
                num_scalar_prefetch=0,
                grid=(tiles_per_split,),
                in_specs=[pl.BlockSpec((tile_n, c), lambda k: (k, 0))],
                out_specs=pl.BlockSpec((1, 1), lambda k: (0, 0)),
                scratch_shapes=[pltpu.VMEM((c, c), jnp.float32)]),
            compiler_params=pltpu.CompilerParams(
                dimension_semantics=("arbitrary",),
                vmem_limit_bytes=vmem_limit),
            cost_estimate=cost,
        )(output)
        return out[0, 0]

    # v7x path: one partial confusion matrix per TensorCore (CORE_PARALLEL),
    # summed + normalized by a tiny O(C) epilogue in plain JAX.
    tps = tiles_per_split
    partials = pl.pallas_call(
        kernel,
        out_shape=jax.ShapeDtypeStruct((num_splits, c, c), jnp.float32),
        grid_spec=pltpu.PrefetchScalarGridSpec(
            num_scalar_prefetch=0,
            grid=(num_splits, tiles_per_split),
            in_specs=[pl.BlockSpec((tile_n, c), lambda s, k: (s * tps + k, 0))],
            out_specs=pl.BlockSpec((None, c, c), lambda s, k: (s, 0, 0)),
            scratch_shapes=[pltpu.VMEM((c, c), jnp.float32)]),
        compiler_params=pltpu.CompilerParams(
            dimension_semantics=(pltpu.CORE_PARALLEL, pltpu.ARBITRARY),
            vmem_limit_bytes=vmem_limit),
        cost_estimate=cost,
    )(output)

    # torch: ccm / sum(ccm, dim=1) divides COLUMN j by rowsum[j] (trailing-axis
    # broadcast): total = sum_j colsum[j]/rowsum[j], trace = sum_j diag[j]/rowsum[j].
    ccm = partials[0] + partials[1]
    rowsum = jnp.sum(ccm, axis=1)
    colsum = jnp.sum(ccm, axis=0)
    diag = jnp.diagonal(ccm)
    inv = 1.0 / rowsum
    return (jnp.sum(colsum * inv) - jnp.sum(diag * inv)) / c


def _reference_jax(output: jax.Array, t: float = 2.0) -> jax.Array:
    # Pure-JAX reference mirroring the PyTorch module exactly
    # (keeps the +1e-5 epsilon and the global weight normalization).
    n, c = output.shape
    x = output.astype(jnp.float32) / t
    sm = jax.nn.softmax(x, axis=1)
    ent = -jnp.sum(sm * jnp.log(sm + 1e-5), axis=1)
    w = 1.0 + jnp.exp(-ent)
    w = (n * w / jnp.sum(w))[:, None]
    ccm = (sm * w).T @ sm
    ccm = ccm / jnp.sum(ccm, axis=1)  # trailing-axis broadcast, like torch
    return (jnp.sum(ccm) - jnp.trace(ccm)) / c


if __name__ == "__main__":
    key = jax.random.PRNGKey(0)
    k1, k2 = jax.random.split(key)

    # Small shape consistent with the module: [n_sample=8, n_class=32].
    logits = jax.random.normal(k1, (8, 32), dtype=jnp.float32)
    loss = jax.block_until_ready(class_confusion_loss(logits, t=2.0))
    ref = _reference_jax(logits, t=2.0)
    # Tolerance covers the documented algebraic rewrites (epsilon-free entropy,
    # dropped global weight normalization, approx-reciprocal+NR), all ~1e-6.
    assert jnp.isfinite(loss), loss
    assert jnp.allclose(loss, ref, atol=5e-5, rtol=5e-5), (loss, ref)

    # Multi-tile + ragged-edge path (exercises in-kernel masking; no jnp.pad).
    logits2 = jax.random.normal(k2, (200, 32), dtype=jnp.float32)
    loss2 = jax.block_until_ready(class_confusion_loss(logits2, t=2.0, tile_n=64))
    ref2 = _reference_jax(logits2, t=2.0)
    assert jnp.allclose(loss2, ref2, atol=2e-4, rtol=2e-4), (loss2, ref2)

    # Native-bf16 input path (half the HBM traffic); loose check vs f32 ref.
    loss3 = jax.block_until_ready(
        class_confusion_loss(logits2.astype(jnp.bfloat16), t=2.0))
    assert jnp.allclose(loss3, ref2, atol=2e-2, rtol=2e-2), (loss3, ref2)

    print("KERNEL_OK")
</pallas_src>

<mosaic_0001>
module attributes {stable_mosaic.version = 11 : i64} {
  func.func @_mcc_kernel(%arg0: i32, %arg1: memref<8x32xf32, #tpu.memory_space<vmem>>, %arg2: memref<1x1xf32, #tpu.memory_space<vmem>>, %arg3: memref<32x32xf32, #tpu.memory_space<vmem>>) attributes {dimension_semantics = [#tpu.dimension_semantics<arbitrary>], iteration_bounds = array<i64: 1>, scalar_prefetch = 0 : i64, scratch_operands = 1 : i64, tpu.core_type = #tpu.core_type<tc>, window_params = [{transform_indices = @transform_0, window_bounds = array<i64: 8, 32>}, {pipeline_mode = #tpu.pipeline_mode<synchronous>, transform_indices = @transform_1, window_bounds = array<i64: 1, 1>}]} {
    %c0_i32 = arith.constant 0 : i32
    %0 = arith.cmpi eq, %arg0, %c0_i32 : i32
    %1 = arith.extui %0 : i1 to i32
    %c0_i32_0 = arith.constant 0 : i32
    %2 = arith.cmpi ne, %1, %c0_i32_0 : i32
    scf.if %2 {
      %cst_15 = arith.constant 0.000000e+00 : f32
      %39 = vector.broadcast %cst_15 : f32 to vector<32x32xf32>
      %c0_16 = arith.constant 0 : index
      %c0_17 = arith.constant 0 : index
      %40 = vector.load %arg3[%c0_16, %c0_17] : memref<32x32xf32, #tpu.memory_space<vmem>>, vector<32x32xf32>
      tpu.vector_store %arg3[%c0_16, %c0_17], %39 {strides = array<i32>} : memref<32x32xf32, #tpu.memory_space<vmem>>, vector<32x32xf32>,
    } else {
    }
    %c0 = arith.constant 0 : index
    %c0_1 = arith.constant 0 : index
    %3 = vector.load %arg1[%c0, %c0_1] : memref<8x32xf32, #tpu.memory_space<vmem>>, vector<8x32xf32>
    %cst = arith.constant 5.000000e-01 : f32
    %4 = vector.broadcast %cst : f32 to vector<8x32xf32>
    %5 = arith.mulf %3, %4 : vector<8x32xf32>
    %cst_2 = arith.constant dense<0xFF800000> : vector<8xf32>
    %6 = vector.multi_reduction <maximumf>, %5, %cst_2 [1] : vector<8x32xf32> to vector<8xf32>
    %7 = vector.shape_cast %6 : vector<8xf32> to vector<8x1xf32>
    %8 = vector.broadcast %7 : vector<8x1xf32> to vector<8x32xf32>
    %9 = arith.subf %5, %8 : vector<8x32xf32>
    %10 = math.exp %9 : vector<8x32xf32>
    %cst_3 = arith.constant dense<0.000000e+00> : vector<8xf32>
    %11 = vector.multi_reduction <add>, %10, %cst_3 [1] : vector<8x32xf32> to vector<8xf32>
    %12 = vector.shape_cast %11 : vector<8xf32> to vector<8x1xf32>
    %13 = tpu.reciprocal %12 {approx = true} : vector<8x1xf32> -> vector<8x1xf32>
    %14 = arith.mulf %12, %13 : vector<8x1xf32>
    %cst_4 = arith.constant 2.000000e+00 : f32
    %15 = vector.broadcast %cst_4 : f32 to vector<8x1xf32>
    %16 = arith.subf %15, %14 : vector<8x1xf32>
    %17 = arith.mulf %13, %16 : vector<8x1xf32>
    %18 = vector.broadcast %17 : vector<8x1xf32> to vector<8x32xf32>
    %19 = arith.mulf %10, %18 : vector<8x32xf32>
    %20 = math.log %12 : vector<8x1xf32>
    %21 = arith.mulf %19, %9 : vector<8x32xf32>
    %cst_5 = arith.constant dense<0.000000e+00> : vector<8xf32>
    %22 = vector.multi_reduction <add>, %21, %cst_5 [1] : vector<8x32xf32> to vector<8xf32>
    %23 = vector.shape_cast %22 : vector<8xf32> to vector<8x1xf32>
    %24 = arith.subf %20, %23 : vector<8x1xf32>
    %cst_6 = arith.constant 0.000000e+00 : f32
    %25 = vector.broadcast %cst_6 : f32 to vector<8x1xf32>
    %26 = arith.subf %25, %24 : vector<8x1xf32>
    %27 = math.exp %26 : vector<8x1xf32>
    %cst_7 = arith.constant 1.000000e+00 : f32
    %28 = vector.broadcast %cst_7 : f32 to vector<8x1xf32>
    %29 = arith.addf %28, %27 : vector<8x1xf32>
    %30 = vector.broadcast %29 : vector<8x1xf32> to vector<8x32xf32>
    %31 = arith.mulf %19, %30 : vector<8x32xf32>
    %c0_8 = arith.constant 0 : index
    %c0_9 = arith.constant 0 : index
    %32 = vector.load %arg3[%c0_8, %c0_9] : memref<32x32xf32, #tpu.memory_space<vmem>>, vector<32x32xf32>
    %cst_10 = arith.constant dense<0.000000e+00> : vector<32x32xf32>
    %33 = tpu.matmul %31, %19, %cst_10 {dimension_numbers = #tpu.dot_dimension_numbers<[0], [0], [1], [1], [0, 1, 1, 1], [], []>} : vector<8x32xf32>, vector<8x32xf32>, vector<32x32xf32> -> vector<32x32xf32>
    %34 = arith.addf %32, %33 : vector<32x32xf32>
    %c0_11 = arith.constant 0 : index
    %c0_12 = arith.constant 0 : index
    %35 = vector.load %arg3[%c0_11, %c0_12] : memref<32x32xf32, #tpu.memory_space<vmem>>, vector<32x32xf32>
    tpu.vector_store %arg3[%c0_11, %c0_12], %34 {strides = array<i32>} : memref<32x32xf32, #tpu.memory_space<vmem>>, vector<32x32xf32>,
    %c0_i32_13 = arith.constant 0 : i32
    %36 = arith.cmpi eq, %arg0, %c0_i32_13 : i32
    %37 = arith.extui %36 : i1 to i32
    %c0_i32_14 = arith.constant 0 : i32
    %38 = arith.cmpi ne, %37, %c0_i32_14 : i32
    scf.if %38 {
      %c0_15 = arith.constant 0 : index
      %c0_16 = arith.constant 0 : index
      %39 = vector.load %arg3[%c0_15, %c0_16] : memref<32x32xf32, #tpu.memory_space<vmem>>, vector<32x32xf32>
      %cst_17 = arith.constant dense<0.000000e+00> : vector<32xf32>
      %40 = vector.multi_reduction <add>, %39, %cst_17 [1] : vector<32x32xf32> to vector<32xf32>
      %41 = vector.shape_cast %40 : vector<32xf32> to vector<32x1xf32>
      %42 = tpu.iota {dimensions = array<i32: 0>} : vector<32x32xi32>
      %43 = tpu.iota {dimensions = array<i32: 1>} : vector<32x32xi32>
      %44 = arith.cmpi eq, %42, %43 : vector<32x32xi32>
      %cst_18 = arith.constant 0.000000e+00 : f32
      %45 = vector.broadcast %cst_18 : f32 to vector<32x32xf32>
      %46 = arith.select %44, %39, %45 : vector<32x32xi1>, vector<32x32xf32>
      %cst_19 = arith.constant dense<0.000000e+00> : vector<32xf32>
      %47 = vector.multi_reduction <add>, %46, %cst_19 [1] : vector<32x32xf32> to vector<32xf32>
      %48 = vector.shape_cast %47 : vector<32xf32> to vector<32x1xf32>
      %49 = arith.divf %48, %41 : vector<32x1xf32>
      %cst_20 = arith.constant dense<0.000000e+00> : vector<1xf32>
      %50 = vector.multi_reduction <add>, %49, %cst_20 [0] : vector<32x1xf32> to vector<1xf32>
      %51 = vector.shape_cast %50 : vector<1xf32> to vector<1x1xf32>
      %cst_21 = arith.constant 3.125000e-02 : f32
      %52 = vector.broadcast %cst_21 : f32 to vector<1x1xf32>
      %53 = arith.mulf %51, %52 : vector<1x1xf32>
      %cst_22 = arith.constant 1.000000e+00 : f32
      %54 = vector.broadcast %cst_22 : f32 to vector<1x1xf32>
      %55 = arith.subf %54, %53 : vector<1x1xf32>
      %c0_23 = arith.constant 0 : index
      %c0_24 = arith.constant 0 : index
      %56 = vector.load %arg2[%c0_23, %c0_24] : memref<1x1xf32, #tpu.memory_space<vmem>>, vector<1x1xf32>
      tpu.vector_store %arg2[%c0_23, %c0_24], %55 {strides = array<i32>} : memref<1x1xf32, #tpu.memory_space<vmem>>, vector<1x1xf32>,
    } else {
    }
    return
  }
  func.func @transform_0(%arg0: i32) -> (i32, i32) {
    %c0_i32 = arith.constant 0 : i32
    %c0_i32_0 = arith.constant 0 : i32
    return %arg0, %c0_i32 : i32, i32
  }
  func.func @transform_1(%arg0: i32) -> (i32, i32) {
    %c0_i32 = arith.constant 0 : i32
    %c0_i32_0 = arith.constant 0 : i32
    %c0_i32_1 = arith.constant 0 : i32
    return %c0_i32, %c0_i32_0 : i32, i32
  }
}

</mosaic_0001>

<llo_original>
// kernel: tpu_custom_call.1
$region0: #{tpu_custom_call.1}
  #allocation0 [shape = 'u32[]', space=smem, size = 0x4, offset = 0x4, fixed_abs, tag = 'smem constant byte address 0x4 - core index']
  #allocation1 [shape = 'u32[144,128]{1,0:T(1,128)}', space=vmem, size = 0x12000, scoped, tag = 'internal scratch']
  #allocation2 [shape = 'f32[32,32]{1,0:T(8,128)}', space=vmem, size = 0x4000, scoped, tag = 'scratch operand']
  %s0 = inlined_call_operand.hbm [shape: f32[8,32], index: 0, kind: input, shape index: {}]
  %s1 = inlined_call_operand.hbm [shape: f32[1,1], index: 1, kind: output, shape index: {}]
  %s2 = sld [smem:[#allocation0]]
  $region26: #{tpu_custom_call.1} parent=0
    _
  %s4 = ssub.s32 1, %s2
  %s5 = scalar_select 0, %s4, %s2
  $region1: #{tpu_custom_call.1} parent=0
    #allocation3 [shape = 'u8[4096]{0}', space=vmem, size = 0x1000, scoped, tag = 'input window, operand 0, single buffered']
    #allocation4 [shape = 's32[1]{0}', space=sflag, size = 0x4, scoped, tag = 'scoped memory for tpu_custom_call.1']
    #allocation5 [shape = 's32[1]{0}', space=sflag, size = 0x4, scoped, tag = 'scoped memory for tpu_custom_call.1']
    #allocation6 [shape = 'u8[512]{0}', space=vmem, size = 0x400, scoped, tag = 'output window, operand 0, single buffered']
    %6 = vsyncpa [#allocation4], 0
    %7 = vsyncpa [#allocation5], 0
    // Predicated region
    $region2: #{tpu_custom_call.1} parent=1 // pred_check
      _
    $region3: #{tpu_custom_call.1} parent=1 // pred_check_branch
      %9 = sbr.rel (0) target = $region5
    $region4: #{tpu_custom_call.1} parent=1 // pred_region
      %s11 = ssub.s32 128, 128
      %12 = vsyncadd [#allocation4], %s11
      %s14 = sshll.u32 [#allocation3], 4
      %s15 = int_to_ptr.vmem [resolvable:$true] %s14
      %17 = dma.hbm_to_vmem [thread:$0]  %s0, 128, %s15, [#allocation4]
    $region5: #{tpu_custom_call.1} parent=1 // pred_fallthru
      _
    // Predicated region
    $region6: #{tpu_custom_call.1} parent=1 // pred_check
      _
    $region7: #{tpu_custom_call.1} parent=1 // pred_check_branch
      %19 = sbr.rel (0) target = $region9
    $region8: #{tpu_custom_call.1} parent=1 // pred_region
      %20 = dma.done [#allocation4], 128
    $region9: #{tpu_custom_call.1} parent=1 // pred_fallthru
      _
    %p21 = scmp.eq.s32.totalorder 0, 0
    // Predicated region
    $region10: #{tpu_custom_call.1} parent=1 // pred_check
      %p22 = pneg %p21
    $region11: #{tpu_custom_call.1} parent=1 // pred_check_branch
      %24 = sbr.rel (%p22) target = $region13
    $region12: #{tpu_custom_call.1} parent=1 // pred_region
      %vm25 = vcmask 261120
      %26 = vst.msk [vmem:[#allocation2] sm:$0xff] %vm25, 0.0
      %27 = vst.msk [vmem:[#allocation2 + $0x8] sm:$0xff] %vm25, 0.0
      %28 = vst.msk [vmem:[#allocation2 + $0x10] sm:$0xff] %vm25, 0.0
      %29 = vst.msk [vmem:[#allocation2 + $0x18] sm:$0xff] %vm25, 0.0
    $region13: #{tpu_custom_call.1} parent=1 // pred_fallthru
      _
    %v30 = vld [vmem:[#allocation3] sm:$0xff]
    %v31 = vmul.f32 %v30, 0.5
    %vm32 = vcmask 261120
    %v33 = vsel %vm32, %v31, -inf
    %34 = vmax.xlane.f32.xlu0 %v33
    %v35 = vpop.xlane.xlu0 %34
    %v36 = vsub.f32 %v31, %v35
    %v37 = vmul.f32 %v36, 1.442695
    %v38 = vpow.pop %v37
    %v39 = vsel %vm32, %v38, 0.0
    %40 = vadd.xlane.f32.xlu0 %v39
    %v41 = vpop.xlane.xlu0 %40
    %v42 = vrcp.pop %v41
    %v43 = vmul.f32 %v41, %v42
    %v44 = vsub.f32 2.0, %v43
    %v45 = vmul.f32 %v42, %v44
    %v46 = vmul.f32 %v38, %v45
    %v47 = vlog2.pop %v41
    %v48 = vmul.f32 %v47, 0.6931472
    %v49 = vmul.f32 %v46, %v36
    %v50 = vsel %vm32, %v49, 0.0
    %51 = vadd.xlane.f32.xlu0 %v50
    %v52 = vpop.xlane.xlu0 %51
    %v53 = vsub.f32 %v48, %v52
    %v54 = vsub.f32 0.0, %v53
    %v55 = vmul.f32 %v54, 1.442695
    %v56 = vpow.pop %v55
    %v57 = vadd.f32 %v56, 1.0
    %v58 = vmul.f32 %v46, %v57
    %v59 = vld [vmem:[#allocation2] sm:$0xff]
    %v60 = vld [vmem:[#allocation2 + $0x8] sm:$0xff]
    %v61 = vld [vmem:[#allocation2 + $0x10] sm:$0xff]
    %v62 = vld [vmem:[#allocation2 + $0x18] sm:$0xff]
    %63 = vxpose.xlu0.b32.start [1/16] %v58, 128
    %64 = vxpose.xlu0.b32.cont [2/16] 0.0, 128
    %65 = vxpose.xlu0.b32.cont [3/16] 0.0, 128
    %66 = vxpose.xlu0.b32.cont [4/16] 0.0, 128
    %67 = vxpose.xlu0.b32.cont [5/16] 0.0, 128
    %68 = vxpose.xlu0.b32.cont [6/16] 0.0, 128
    %69 = vxpose.xlu0.b32.cont [7/16] 0.0, 128
    %70 = vxpose.xlu0.b32.cont [8/16] 0.0, 128
    %71 = vxpose.xlu0.b32.cont [9/16] 0.0, 128
    %72 = vxpose.xlu0.b32.cont [10/16] 0.0, 128
    %73 = vxpose.xlu0.b32.cont [11/16] 0.0, 128
    %74 = vxpose.xlu0.b32.cont [12/16] 0.0, 128
    %75 = vxpose.xlu0.b32.cont [13/16] 0.0, 128
    %76 = vxpose.xlu0.b32.cont [14/16] 0.0, 128
    %77 = vxpose.xlu0.b32.cont [15/16] 0.0, 128
    %78 = vxpose.xlu0.b32.end [16/16] 0.0, 128
    %v79 = vpop.trf.xlu0
    %v80 = vpop.trf.xlu0
    %v81 = vpop.trf.xlu0
    %v82 = vpop.trf.xlu0
    %v83 = vpop.trf.xlu0
    %v84 = vpop.trf.xlu0
    %v85 = vpop.trf.xlu0
    %v86 = vpop.trf.xlu0
    %v87 = vpop.trf.xlu0
    %v88 = vpop.trf.xlu0
    %v89 = vpop.trf.xlu0
    %v90 = vpop.trf.xlu0
    %v91 = vpop.trf.xlu0
    %v92 = vpop.trf.xlu0
    %v93 = vpop.trf.xlu0
    %v94 = vpop.trf.xlu0
    %vm95 = vcmask 64512
    %v97 = vsel %vm95, %v79, 0
    %v100 = vsel %vm95, %v80, 0
    %v103 = vsel %vm95, %v81, 0
    %v106 = vsel %vm95, %v82, 0
    %108 = vmatprep.subr.mxu0 0.0
    %109 = vmatpush1.msra.mxu0 %v46
    %110 = vmatprep.subr.mxu0 0.0
    %111 = vmatpush1.msra.mxu0 0.0
    %112 = vmatprep.subr.mxu0 0.0
    %113 = vmatpush1.msra.mxu0 0.0
    %114 = vmatprep.subr.mxu0 0.0
    %115 = vmatpush1.msra.mxu0 0.0
    %116 = vmatprep.subr.mxu0 0.0
    %117 = vmatpush1.msra.mxu0 0.0
    %118 = vmatprep.subr.mxu0 0.0
    %119 = vmatpush1.msra.mxu0 0.0
    %120 = vmatprep.subr.mxu0 0.0
    %121 = vmatpush1.msra.mxu0 0.0
    %122 = vmatprep.subr.mxu0 0.0
    %123 = vmatpush1.msra.mxu0 0.0
    %124 = vmatprep.subr.mxu0 0.0
    %125 = vmatpush1.msra.mxu0 0.0
    %126 = vmatprep.subr.mxu0 0.0
    %127 = vmatpush1.msra.mxu0 0.0
    %128 = vmatprep.subr.mxu0 0.0
    %129 = vmatpush1.msra.mxu0 0.0
    %130 = vmatprep.subr.mxu0 0.0
    %131 = vmatpush1.msra.mxu0 0.0
    %132 = vmatprep.subr.mxu0 0.0
    %133 = vmatpush1.msra.mxu0 0.0
    %134 = vmatprep.subr.mxu0 0.0
    %135 = vmatpush1.msra.mxu0 0.0
    %136 = vmatprep.subr.mxu0 0.0
    %137 = vmatpush1.msra.mxu0 0.0
    %138 = vmatprep.subr.mxu0 0.0
    %139 = vmatpush1.msra.mxu0 0.0
    %140 = vmatprep.subr.mxu0 0.0
    %141 = vmatpush1.msra.mxu0 0.0
    %142 = vmatprep.subr.mxu0 0.0
    %143 = vmatpush1.msra.mxu0 0.0
    %144 = vmatprep.subr.mxu0 0.0
    %145 = vmatpush1.msra.mxu0 0.0
    %146 = vmatprep.subr.mxu0 0.0
    %147 = vmatpush1.msra.mxu0 0.0
    %148 = vmatprep.subr.mxu0 0.0
    %149 = vmatpush1.msra.mxu0 0.0
    %150 = vmatprep.subr.mxu0 0.0
    %151 = vmatpush1.msra.mxu0 0.0
    %152 = vmatprep.subr.mxu0 0.0
    %153 = vmatpush1.msra.mxu0 0.0
    %154 = vmatprep.subr.mxu0 0.0
    %155 = vmatpush1.msra.mxu0 0.0
    %156 = vmatprep.subr.mxu0 0.0
    %157 = vmatpush1.msra.mxu0 0.0
    %158 = vmatprep.subr.mxu0 0.0
    %159 = vmatpush1.msra.mxu0 0.0
    %160 = vmatprep.subr.mxu0 0.0
    %161 = vmatpush1.msra.mxu0 0.0
    %162 = vmatprep.subr.mxu0 0.0
    %163 = vmatpush1.msra.mxu0 0.0
    %164 = vmatprep.subr.mxu0 0.0
    %165 = vmatpush1.msra.mxu0 0.0
    %166 = vmatprep.subr.mxu0 0.0
    %167 = vmatpush1.msra.mxu0 0.0
    %168 = vmatprep.subr.mxu0 0.0
    %169 = vmatpush1.msra.mxu0 0.0
    %170 = vmatprep.subr.mxu0 0.0
    %171 = vmatpush1.msra.mxu0 0.0
    %172 = vmatprep.mubr.f32.mxu0 0.0
    %173 = vmatmul.mubr.f32.gmra.mrb[0].mxu0 %v97
    %v174 = vpop.f32.mrb[0].mxu0
    %v175 = vadd.f32 0.0, %v174
    %v176 = vpop.f32.mrb[0].mxu0
    %177 = vmatprep.mubr.f32.mxu0 0.0
    %178 = vmatmul.mubr.f32.gmra.mrb[0].mxu0 %v100
    %v179 = vpop.f32.mrb[0].mxu0
    %v180 = vadd.f32 0.0, %v179
    %v181 = vpop.f32.mrb[0].mxu0
    %182 = vmatprep.mubr.f32.mxu0 0.0
    %183 = vmatmul.mubr.f32.gmra.mrb[0].mxu0 %v103
    %v184 = vpop.f32.mrb[0].mxu0
    %v185 = vadd.f32 0.0, %v184
    %v186 = vpop.f32.mrb[0].mxu0
    %187 = vmatprep.mubr.f32.mxu0 0.0
    %188 = vmatmul.mubr.f32.gmra.mrb[0].mxu0 %v106
    %v189 = vpop.f32.mrb[0].mxu0
    %v190 = vadd.f32 0.0, %v189
    %v191 = vpop.f32.mrb[0].mxu0
    %192 = vdwg.mxu0
    %v193 = vadd.f32 %v59, %v175
    %v194 = vadd.f32 %v60, %v180
    %v195 = vadd.f32 %v61, %v185
    %v196 = vadd.f32 %v62, %v190
    %197 = vst.msk [vmem:[#allocation2] sm:$0xff] %vm32, %v193
    %198 = vst.msk [vmem:[#allocation2 + $0x8] sm:$0xff] %vm32, %v194
    %199 = vst.msk [vmem:[#allocation2 + $0x10] sm:$0xff] %vm32, %v195
    %200 = vst.msk [vmem:[#allocation2 + $0x18] sm:$0xff] %vm32, %v196
    // Predicated region
    $region14: #{tpu_custom_call.1} parent=1 // pred_check
      %p201 = pneg %p21
    $region15: #{tpu_custom_call.1} parent=1 // pred_check_branch
      %203 = sbr.rel (%p201) target = $region17
    $region16: #{tpu_custom_call.1} parent=1 // pred_region
      %v204 = vld [vmem:[#allocation2] sm:$0xff]
      %v205 = vld [vmem:[#allocation2 + $0x8] sm:$0xff]
      %v206 = vld [vmem:[#allocation2 + $0x10] sm:$0xff]
      %v207 = vld [vmem:[#allocation2 + $0x18] sm:$0xff]
      %v208 = vsel %vm32, %v204, 0.0
      %209 = vadd.xlane.f32.xlu0 %v208
      %v210 = vpop.xlane.xlu0 %209
      %v211 = vsel %vm32, %v205, 0.0
      %212 = vadd.xlane.f32.xlu0 %v211
      %v213 = vpop.xlane.xlu0 %212
      %v214 = vsel %vm32, %v206, 0.0
      %215 = vadd.xlane.f32.xlu0 %v214
      %v216 = vpop.xlane.xlu0 %215
      %v217 = vsel %vm32, %v207, 0.0
      %218 = vadd.xlane.f32.xlu0 %v217
      %v219 = vpop.xlane.xlu0 %218
      %v220 = vlaneseq
      %v221 = vshrl.u32 %v220, 7
      %v222 = vadd.s32 %v221, 8
      %v223 = vadd.s32 %v221, 16
      %v224 = vadd.s32 %v221, 24
      %v225 = vlaneseq
      %v226 = vand.u32 %v225, 127
      %vm227 = vcmp.eq.s32.totalorder %v221, %v226
      %vm228 = vcmp.eq.s32.totalorder %v222, %v226
      %vm229 = vcmp.eq.s32.totalorder %v223, %v226
      %vm230 = vcmp.eq.s32.totalorder %v224, %v226
      %v231 = vsel %vm227, %v204, 0.0
      %v232 = vsel %vm228, %v205, 0.0
      %v233 = vsel %vm229, %v206, 0.0
      %v234 = vsel %vm230, %v207, 0.0
      %v235 = vsel %vm32, %v231, 0.0
      %236 = vadd.xlane.f32.xlu0 %v235
      %v237 = vpop.xlane.xlu0 %236
      %v238 = vsel %vm32, %v232, 0.0
      %239 = vadd.xlane.f32.xlu0 %v238
      %v240 = vpop.xlane.xlu0 %239
      %v241 = vsel %vm32, %v233, 0.0
      %242 = vadd.xlane.f32.xlu0 %v241
      %v243 = vpop.xlane.xlu0 %242
      %v244 = vsel %vm32, %v234, 0.0
      %245 = vadd.xlane.f32.xlu0 %v244
      %v246 = vpop.xlane.xlu0 %245
      %v247 = vrcp.pop %v210
      %v248 = vmul.f32 %v237, %v247
      %v249 = vrcp.pop %v213
      %v250 = vmul.f32 %v240, %v249
      %v251 = vrcp.pop %v216
      %v252 = vmul.f32 %v243, %v251
      %v253 = vrcp.pop %v219
      %v254 = vmul.f32 %v246, %v253
      %v255 = vadd.f32 %v248, %v250
      %v256 = vadd.f32 %v255, %v252
      %v257 = vadd.f32 %v256, %v254
      %v258 = vrot.slane %v257, 4
      %v259 = vadd.f32 %v257, %v258
      %v260 = vrot.slane %v259, 2
      %v261 = vadd.f32 %v259, %v260
      %v262 = vrot.slane %v261, 1
      %v263 = vadd.f32 %v261, %v262
      %v264 = vmul.f32 %v263, 0.03125
      %v265 = vsub.f32 1.0, %v264
      %vm266 = vcmask 0
      %267 = vst.msk [vmem:[#allocation6] sm:$0x1] %vm266, %v265
    $region17: #{tpu_custom_call.1} parent=1 // pred_fallthru
      _
    // Predicated region
    $region18: #{tpu_custom_call.1} parent=1 // pred_check
      _
    $region19: #{tpu_custom_call.1} parent=1 // pred_check_branch
      %269 = sbr.rel (0) target = $region21
    $region20: #{tpu_custom_call.1} parent=1 // pred_region
      %s271 = ssub.s32 16, 16
      %272 = vsyncadd [#allocation5], %s271
      %s274 = sshll.u32 [#allocation6], 4
      %s275 = int_to_ptr.vmem [resolvable:$true] %s274
      %277 = dma.vmem_to_hbm [thread:$0]  %s275, 16, %s1, [#allocation5]
    $region21: #{tpu_custom_call.1} parent=1 // pred_fallthru
      _
    // Predicated region
    $region22: #{tpu_custom_call.1} parent=1 // pred_check
      _
    $region23: #{tpu_custom_call.1} parent=1 // pred_check_branch
      %279 = sbr.rel (0) target = $region25
    $region24: #{tpu_custom_call.1} parent=1 // pred_region
      %280 = dma.done [#allocation5], 16
    $region25: #{tpu_custom_call.1} parent=1 // pred_fallthru
      _
    %281 = vsyncpa [#allocation4], 1
    %282 = vsyncpa [#allocation5], 1

</llo_original>
